<compile_context>
chip_gen: v5e
topology: v5e:2x2
jax: 0.10.0
libtpu: 0.0.40
codegen_flags: <defaults>
</compile_context>

<pallas_src>
import functools
import math

import jax
import jax.numpy as jnp
from jax.experimental import pallas as pl
from jax.experimental.pallas import tpu as pltpu


def _round_up(x, m):
    return ((x + m - 1) // m) * m


# --------------------------------------------------------------------------
# Tiled matmul + fused bias (+ optional ReLU) epilogue:  y = act(x @ w + b)
# --------------------------------------------------------------------------

def _matmul_bias_kernel(x_ref, w_ref, b_ref, o_ref, acc_ref, *, act):
    k = pl.program_id(2)

    @pl.when(k == 0)
    def _():
        acc_ref[...] = jnp.zeros_like(acc_ref)

    acc_ref[...] += jnp.dot(x_ref[...], w_ref[...],
                            preferred_element_type=jnp.float32)

    @pl.when(k == pl.num_programs(2) - 1)
    def _():
        y = acc_ref[...] + b_ref[...]
        if act == "relu":
            y = jnp.maximum(y, 0.0)
        o_ref[...] = y


def matmul_bias(x, w, b, *, act=None, tm=256, tn=256, tk=512):
    """y = act(x @ w + b).  x: (M, K) f32, w: (K, N) f32, b: (N,) f32.

    Matmul operands are cast to bf16 (MXU-native); accumulation stays f32.
    M/K/N are zero-padded up to the tile grid (N always to a multiple of 128
    so stores are lane-dense); padding is sliced off after the call.
    """
    M, K = x.shape
    N = w.shape[1]
    tm = min(tm, _round_up(M, 8))
    tk = min(tk, _round_up(K, 128))
    tn = min(tn, _round_up(N, 128))
    Mp, Kp, Np = _round_up(M, tm), _round_up(K, tk), _round_up(N, tn)

    xp = x if (Mp == M and Kp == K) else jnp.pad(x, ((0, Mp - M), (0, Kp - K)))
    wp = w if (Kp == K and Np == N) else jnp.pad(w, ((0, Kp - K), (0, Np - N)))
    bp = b if Np == N else jnp.pad(b, (0, Np - N))

    out = pl.pallas_call(
        functools.partial(_matmul_bias_kernel, act=act),
        out_shape=jax.ShapeDtypeStruct((Mp, Np), jnp.float32),
        grid=(Mp // tm, Np // tn, Kp // tk),
        in_specs=[
            pl.BlockSpec((tm, tk), lambda i, j, k: (i, k)),
            pl.BlockSpec((tk, tn), lambda i, j, k: (k, j)),
            pl.BlockSpec((1, tn), lambda i, j, k: (0, j)),
        ],
        out_specs=pl.BlockSpec((tm, tn), lambda i, j, k: (i, j)),
        scratch_shapes=[pltpu.VMEM((tm, tn), jnp.float32)],
        compiler_params=pltpu.CompilerParams(
            dimension_semantics=("parallel", "parallel", "arbitrary"),
            vmem_limit_bytes=32 * 1024 * 1024),
    )(xp.astype(jnp.bfloat16), wp.astype(jnp.bfloat16),
      bp.reshape(1, Np).astype(jnp.float32))

    return out if (Mp == M and Np == N) else out[:M, :N]


# --------------------------------------------------------------------------
# Fused LSTM recurrent scan: one grid step per timestep, h/c in VMEM scratch.
# Gate layout along 4H follows PyTorch order: [i | f | g | o].
# --------------------------------------------------------------------------

def _lstm_scan_kernel(g_ref, whh_ref, y_ref, h_ref, c_ref, *, H):
    t = pl.program_id(1)

    @pl.when(t == 0)
    def _():
        h_ref[...] = jnp.zeros_like(h_ref)
        c_ref[...] = jnp.zeros_like(c_ref)

    # gates = (x_t @ W_ih^T + b_ih + b_hh)  +  h_{t-1} @ W_hh^T
    gates = g_ref[0] + jnp.dot(h_ref[...].astype(jnp.bfloat16), whh_ref[...],
                               preferred_element_type=jnp.float32)
    i = jax.nn.sigmoid(gates[:, 0 * H:1 * H])
    f = jax.nn.sigmoid(gates[:, 1 * H:2 * H])
    g = jnp.tanh(gates[:, 2 * H:3 * H])
    o = jax.nn.sigmoid(gates[:, 3 * H:4 * H])
    c_new = f * c_ref[...] + i * g
    h_new = o * jnp.tanh(c_new)
    c_ref[...] = c_new
    h_ref[...] = h_new
    y_ref[0] = h_new


def lstm_recurrent_scan(gates_tm, w_hh_t):
    """Sequential LSTM time scan.

    gates_tm: (T, B, 4H) f32  -- precomputed x @ W_ih^T + b_ih + b_hh
    w_hh_t:   (H, 4H)     f32 -- recurrent weights (transposed), kept resident
    returns   (T, B, H)   f32 -- per-timestep hidden states
    """
    T, B, G4 = gates_tm.shape
    H = G4 // 4
    # Batch-parallel leading axis (v7x megacore) when the sublane constraint
    # allows it (each half must stay a multiple of 8 rows).
    b_blocks = 2 if (B % 16 == 0) else 1
    Bb = B // b_blocks
    return pl.pallas_call(
        functools.partial(_lstm_scan_kernel, H=H),
        out_shape=jax.ShapeDtypeStruct((T, B, H), jnp.float32),
        grid=(b_blocks, T),
        in_specs=[
            pl.BlockSpec((1, Bb, G4), lambda b, t: (t, b, 0)),
            pl.BlockSpec((H, G4), lambda b, t: (0, 0)),   # resident weights
        ],
        out_specs=pl.BlockSpec((1, Bb, H), lambda b, t: (t, b, 0)),
        scratch_shapes=[pltpu.VMEM((Bb, H), jnp.float32),   # h state
                        pltpu.VMEM((Bb, H), jnp.float32)],  # c state
        compiler_params=pltpu.CompilerParams(
            dimension_semantics=("parallel", "arbitrary")),
    )(gates_tm, w_hh_t.astype(jnp.bfloat16))


# --------------------------------------------------------------------------
# NnetAM forward: LSTM stack (the `nnet`) followed by the output Linear.
# --------------------------------------------------------------------------

def nnet_am_forward(data, params):
    """data: (B, T, feat) -> logits (B, T, output_size)."""
    B, T, _ = data.shape
    x = jnp.transpose(data, (1, 0, 2))                 # time-major (T, B, F)
    for lp in params["lstm_layers"]:
        d_in = x.shape[-1]
        # big fused input projection for all timesteps at once
        g = matmul_bias(x.reshape(T * B, d_in), lp["w_ih_t"], lp["b"])
        # sequential recurrence, state held in VMEM
        x = lstm_recurrent_scan(g.reshape(T, B, -1), lp["w_hh_t"])
    H = x.shape[-1]
    # NnetAM discards (h, c); only nnet_output feeds the output layer.
    out = matmul_bias(x.reshape(T * B, H), params["out_w_t"], params["out_b"])
    return jnp.transpose(out.reshape(T, B, -1), (1, 0, 2))


# --------------------------------------------------------------------------
# Deterministic parameter init (PyTorch nn.LSTM / nn.Linear defaults)
# --------------------------------------------------------------------------

def _uniform(key, shape, bound):
    return jax.random.uniform(key, shape, jnp.float32, -bound, bound)


def init_params(key, feat_dim, hidden_size, num_layers, output_size):
    keys = iter(jax.random.split(key, 4 * num_layers + 2))
    bound = 1.0 / math.sqrt(hidden_size)
    layers = []
    d_in = feat_dim
    for _ in range(num_layers):
        w_ih = _uniform(next(keys), (d_in, 4 * hidden_size), bound)        # W_ih^T
        w_hh = _uniform(next(keys), (hidden_size, 4 * hidden_size), bound)  # W_hh^T
        b_ih = _uniform(next(keys), (4 * hidden_size,), bound)
        b_hh = _uniform(next(keys), (4 * hidden_size,), bound)
        layers.append({"w_ih_t": w_ih, "w_hh_t": w_hh, "b": b_ih + b_hh})
        d_in = hidden_size
    out_w = _uniform(next(keys), (hidden_size, output_size), bound)         # W_out^T
    out_b = _uniform(next(keys), (output_size,), bound)
    return {"lstm_layers": layers, "out_w_t": out_w, "out_b": out_b}


# --------------------------------------------------------------------------

if __name__ == "__main__":
    # small, module-consistent shapes: (batch, seq, feat), hidden, output
    B, T, FEAT = 16, 16, 40
    HIDDEN, NUM_LAYERS, OUTPUT_SIZE = 32, 2, 10

    key = jax.random.PRNGKey(0)
    kp, kx = jax.random.split(key)
    params = init_params(kp, FEAT, HIDDEN, NUM_LAYERS, OUTPUT_SIZE)
    data = jax.random.normal(kx, (B, T, FEAT), jnp.float32)

    fwd = jax.jit(nnet_am_forward)
    out = jax.block_until_ready(fwd(data, params))

    assert out.shape == (B, T, OUTPUT_SIZE), out.shape
    assert bool(jnp.all(jnp.isfinite(out)))
    print("KERNEL_OK")
</pallas_src>

<mosaic_0001>
module attributes {stable_mosaic.version = 11 : i64} {
  func.func @_matmul_bias_kernel(%arg0: i32, %arg1: i32, %arg2: i32, %arg3: memref<256x128xbf16, #tpu.memory_space<vmem>>, %arg4: memref<128x128xbf16, #tpu.memory_space<vmem>>, %arg5: memref<1x128xf32, #tpu.memory_space<vmem>>, %arg6: memref<256x128xf32, #tpu.memory_space<vmem>>, %arg7: memref<256x128xf32, #tpu.memory_space<vmem>>) attributes {dimension_semantics = [#tpu.dimension_semantics<parallel>, #tpu.dimension_semantics<parallel>, #tpu.dimension_semantics<arbitrary>], iteration_bounds = array<i64: 1, 1, 1>, scalar_prefetch = 0 : i64, scratch_operands = 1 : i64, tpu.core_type = #tpu.core_type<tc>, window_params = [{transform_indices = @transform_0, window_bounds = array<i64: 256, 128>}, {transform_indices = @transform_1, window_bounds = array<i64: 128, 128>}, {transform_indices = @transform_2, window_bounds = array<i64: 1, 128>}, {transform_indices = @transform_3, window_bounds = array<i64: 256, 128>}]} {
    %c0_i32 = arith.constant 0 : i32
    %0 = arith.cmpi eq, %arg2, %c0_i32 : i32
    %1 = arith.extui %0 : i1 to i32
    %c0_i32_0 = arith.constant 0 : i32
    %2 = arith.cmpi ne, %1, %c0_i32_0 : i32
    scf.if %2 {
      %cst_10 = arith.constant 0.000000e+00 : f32
      %12 = vector.broadcast %cst_10 : f32 to vector<256x128xf32>
      %c0_11 = arith.constant 0 : index
      %c0_12 = arith.constant 0 : index
      %13 = vector.load %arg7[%c0_11, %c0_12] : memref<256x128xf32, #tpu.memory_space<vmem>>, vector<256x128xf32>
      tpu.vector_store %arg7[%c0_11, %c0_12], %12 {strides = array<i32>} : memref<256x128xf32, #tpu.memory_space<vmem>>, vector<256x128xf32>,
    } else {
    }
    %c0 = arith.constant 0 : index
    %c0_1 = arith.constant 0 : index
    %3 = vector.load %arg7[%c0, %c0_1] : memref<256x128xf32, #tpu.memory_space<vmem>>, vector<256x128xf32>
    %c0_2 = arith.constant 0 : index
    %c0_3 = arith.constant 0 : index
    %4 = vector.load %arg3[%c0_2, %c0_3] : memref<256x128xbf16, #tpu.memory_space<vmem>>, vector<256x128xbf16>
    %c0_4 = arith.constant 0 : index
    %c0_5 = arith.constant 0 : index
    %5 = vector.load %arg4[%c0_4, %c0_5] : memref<128x128xbf16, #tpu.memory_space<vmem>>, vector<128x128xbf16>
    %cst = arith.constant dense<0.000000e+00> : vector<256x128xf32>
    %6 = tpu.matmul %4, %5, %cst {dimension_numbers = #tpu.dot_dimension_numbers<[1], [0], [0], [1], [0, 0, 1, 1], [], []>} : vector<256x128xbf16>, vector<128x128xbf16>, vector<256x128xf32> -> vector<256x128xf32>
    %7 = arith.addf %3, %6 : vector<256x128xf32>
    %c0_6 = arith.constant 0 : index
    %c0_7 = arith.constant 0 : index
    %8 = vector.load %arg7[%c0_6, %c0_7] : memref<256x128xf32, #tpu.memory_space<vmem>>, vector<256x128xf32>
    tpu.vector_store %arg7[%c0_6, %c0_7], %7 {strides = array<i32>} : memref<256x128xf32, #tpu.memory_space<vmem>>, vector<256x128xf32>,
    %c0_i32_8 = arith.constant 0 : i32
    %9 = arith.cmpi eq, %arg2, %c0_i32_8 : i32
    %10 = arith.extui %9 : i1 to i32
    %c0_i32_9 = arith.constant 0 : i32
    %11 = arith.cmpi ne, %10, %c0_i32_9 : i32
    scf.if %11 {
      %c0_10 = arith.constant 0 : index
      %c0_11 = arith.constant 0 : index
      %12 = vector.load %arg7[%c0_10, %c0_11] : memref<256x128xf32, #tpu.memory_space<vmem>>, vector<256x128xf32>
      %c0_12 = arith.constant 0 : index
      %c0_13 = arith.constant 0 : index
      %13 = vector.load %arg5[%c0_12, %c0_13] : memref<1x128xf32, #tpu.memory_space<vmem>>, vector<1x128xf32>
      %14 = vector.broadcast %13 : vector<1x128xf32> to vector<256x128xf32>
      %15 = arith.addf %12, %14 : vector<256x128xf32>
      %c0_14 = arith.constant 0 : index
      %c0_15 = arith.constant 0 : index
      %16 = vector.load %arg6[%c0_14, %c0_15] : memref<256x128xf32, #tpu.memory_space<vmem>>, vector<256x128xf32>
      tpu.vector_store %arg6[%c0_14, %c0_15], %15 {strides = array<i32>} : memref<256x128xf32, #tpu.memory_space<vmem>>, vector<256x128xf32>,
    } else {
    }
    return
  }
  func.func @transform_0(%arg0: i32, %arg1: i32, %arg2: i32) -> (i32, i32) {
    %c0_i32 = arith.constant 0 : i32
    return %arg0, %arg2 : i32, i32
  }
  func.func @transform_1(%arg0: i32, %arg1: i32, %arg2: i32) -> (i32, i32) {
    %c0_i32 = arith.constant 0 : i32
    return %arg2, %arg1 : i32, i32
  }
  func.func @transform_2(%arg0: i32, %arg1: i32, %arg2: i32) -> (i32, i32) {
    %c0_i32 = arith.constant 0 : i32
    %c0_i32_0 = arith.constant 0 : i32
    return %c0_i32, %arg1 : i32, i32
  }
  func.func @transform_3(%arg0: i32, %arg1: i32, %arg2: i32) -> (i32, i32) {
    %c0_i32 = arith.constant 0 : i32
    return %arg0, %arg1 : i32, i32
  }
}

module attributes {stable_mosaic.version = 11 : i64} {
  func.func @_lstm_scan_kernel(%arg0: i32, %arg1: i32, %arg2: memref<1x8x128xf32, #tpu.memory_space<vmem>>, %arg3: memref<32x128xbf16, #tpu.memory_space<vmem>>, %arg4: memref<1x8x32xf32, #tpu.memory_space<vmem>>, %arg5: memref<8x32xf32, #tpu.memory_space<vmem>>, %arg6: memref<8x32xf32, #tpu.memory_space<vmem>>) attributes {dimension_semantics = [#tpu.dimension_semantics<parallel>, #tpu.dimension_semantics<arbitrary>], iteration_bounds = array<i64: 2, 16>, scalar_prefetch = 0 : i64, scratch_operands = 2 : i64, tpu.core_type = #tpu.core_type<tc>, window_params = [{transform_indices = @transform_0, window_bounds = array<i64: 1, 8, 128>}, {pipeline_mode = #tpu.pipeline_mode<synchronous>, transform_indices = @transform_1, window_bounds = array<i64: 32, 128>}, {transform_indices = @transform_2, window_bounds = array<i64: 1, 8, 32>}]} {
    %c0_i32 = arith.constant 0 : i32
    %0 = arith.cmpi eq, %arg1, %c0_i32 : i32
    %1 = arith.extui %0 : i1 to i32
    %c0_i32_0 = arith.constant 0 : i32
    %2 = arith.cmpi ne, %1, %c0_i32_0 : i32
    scf.if %2 {
      %cst_19 = arith.constant 0.000000e+00 : f32
      %41 = vector.broadcast %cst_19 : f32 to vector<8x32xf32>
      %c0_20 = arith.constant 0 : index
      %c0_21 = arith.constant 0 : index
      %42 = vector.load %arg5[%c0_20, %c0_21] : memref<8x32xf32, #tpu.memory_space<vmem>>, vector<8x32xf32>
      tpu.vector_store %arg5[%c0_20, %c0_21], %41 {strides = array<i32>} : memref<8x32xf32, #tpu.memory_space<vmem>>, vector<8x32xf32>,
      %cst_22 = arith.constant 0.000000e+00 : f32
      %43 = vector.broadcast %cst_22 : f32 to vector<8x32xf32>
      %c0_23 = arith.constant 0 : index
      %c0_24 = arith.constant 0 : index
      %44 = vector.load %arg6[%c0_23, %c0_24] : memref<8x32xf32, #tpu.memory_space<vmem>>, vector<8x32xf32>
      tpu.vector_store %arg6[%c0_23, %c0_24], %43 {strides = array<i32>} : memref<8x32xf32, #tpu.memory_space<vmem>>, vector<8x32xf32>,
    } else {
    }
    %c0 = arith.constant 0 : index
    %c0_1 = arith.constant 0 : index
    %c0_2 = arith.constant 0 : index
    %3 = vector.load %arg2[%c0, %c0_1, %c0_2] : memref<1x8x128xf32, #tpu.memory_space<vmem>>, vector<1x8x128xf32>
    %4 = vector.shape_cast %3 : vector<1x8x128xf32> to vector<8x128xf32>
    %c0_3 = arith.constant 0 : index
    %c0_4 = arith.constant 0 : index
    %5 = vector.load %arg5[%c0_3, %c0_4] : memref<8x32xf32, #tpu.memory_space<vmem>>, vector<8x32xf32>
    %6 = arith.truncf %5 : vector<8x32xf32> to vector<8x32xbf16>
    %c0_5 = arith.constant 0 : index
    %c0_6 = arith.constant 0 : index
    %7 = vector.load %arg3[%c0_5, %c0_6] : memref<32x128xbf16, #tpu.memory_space<vmem>>, vector<32x128xbf16>
    %cst = arith.constant dense<0.000000e+00> : vector<8x128xf32>
    %8 = tpu.matmul %6, %7, %cst {dimension_numbers = #tpu.dot_dimension_numbers<[1], [0], [0], [1], [0, 0, 1, 1], [], []>} : vector<8x32xbf16>, vector<32x128xbf16>, vector<8x128xf32> -> vector<8x128xf32>
    %9 = arith.addf %4, %8 : vector<8x128xf32>
    %10 = vector.extract_strided_slice %9 {offsets = [0, 0], sizes = [8, 32], strides = [1, 1]} : vector<8x128xf32> to vector<8x32xf32>
    %11 = arith.negf %10 : vector<8x32xf32>
    %12 = math.exp %11 : vector<8x32xf32>
    %cst_7 = arith.constant 1.000000e+00 : f32
    %13 = vector.broadcast %cst_7 : f32 to vector<8x32xf32>
    %14 = arith.addf %13, %12 : vector<8x32xf32>
    %15 = arith.divf %13, %14 : vector<8x32xf32>
    %16 = vector.extract_strided_slice %9 {offsets = [0, 32], sizes = [8, 32], strides = [1, 1]} : vector<8x128xf32> to vector<8x32xf32>
    %17 = arith.negf %16 : vector<8x32xf32>
    %18 = math.exp %17 : vector<8x32xf32>
    %cst_8 = arith.constant 1.000000e+00 : f32
    %19 = vector.broadcast %cst_8 : f32 to vector<8x32xf32>
    %20 = arith.addf %19, %18 : vector<8x32xf32>
    %21 = arith.divf %19, %20 : vector<8x32xf32>
    %22 = vector.extract_strided_slice %9 {offsets = [0, 64], sizes = [8, 32], strides = [1, 1]} : vector<8x128xf32> to vector<8x32xf32>
    %23 = math.tanh %22 : vector<8x32xf32>
    %24 = vector.extract_strided_slice %9 {offsets = [0, 96], sizes = [8, 32], strides = [1, 1]} : vector<8x128xf32> to vector<8x32xf32>
    %25 = arith.negf %24 : vector<8x32xf32>
    %26 = math.exp %25 : vector<8x32xf32>
    %cst_9 = arith.constant 1.000000e+00 : f32
    %27 = vector.broadcast %cst_9 : f32 to vector<8x32xf32>
    %28 = arith.addf %27, %26 : vector<8x32xf32>
    %29 = arith.divf %27, %28 : vector<8x32xf32>
    %c0_10 = arith.constant 0 : index
    %c0_11 = arith.constant 0 : index
    %30 = vector.load %arg6[%c0_10, %c0_11] : memref<8x32xf32, #tpu.memory_space<vmem>>, vector<8x32xf32>
    %31 = arith.mulf %21, %30 : vector<8x32xf32>
    %32 = arith.mulf %15, %23 : vector<8x32xf32>
    %33 = arith.addf %31, %32 : vector<8x32xf32>
    %34 = math.tanh %33 : vector<8x32xf32>
    %35 = arith.mulf %29, %34 : vector<8x32xf32>
    %c0_12 = arith.constant 0 : index
    %c0_13 = arith.constant 0 : index
    %36 = vector.load %arg6[%c0_12, %c0_13] : memref<8x32xf32, #tpu.memory_space<vmem>>, vector<8x32xf32>
    tpu.vector_store %arg6[%c0_12, %c0_13], %33 {strides = array<i32>} : memref<8x32xf32, #tpu.memory_space<vmem>>, vector<8x32xf32>,
    %c0_14 = arith.constant 0 : index
    %c0_15 = arith.constant 0 : index
    %37 = vector.load %arg5[%c0_14, %c0_15] : memref<8x32xf32, #tpu.memory_space<vmem>>, vector<8x32xf32>
    tpu.vector_store %arg5[%c0_14, %c0_15], %35 {strides = array<i32>} : memref<8x32xf32, #tpu.memory_space<vmem>>, vector<8x32xf32>,
    %c0_16 = arith.constant 0 : index
    %c0_17 = arith.constant 0 : index
    %c0_18 = arith.constant 0 : index
    %38 = vector.load %arg4[%c0_16, %c0_17, %c0_18] : memref<1x8x32xf32, #tpu.memory_space<vmem>>, vector<1x8x32xf32>
    %39 = vector.shape_cast %38 : vector<1x8x32xf32> to vector<8x32xf32>
    %40 = vector.shape_cast %35 : vector<8x32xf32> to vector<1x8x32xf32>
    tpu.vector_store %arg4[%c0_16, %c0_17, %c0_18], %40 {strides = array<i32>} : memref<1x8x32xf32, #tpu.memory_space<vmem>>, vector<1x8x32xf32>,
    return
  }
  func.func @transform_0(%arg0: i32, %arg1: i32) -> (i32, i32, i32) {
    %c0_i32 = arith.constant 0 : i32
    %c0_i32_0 = arith.constant 0 : i32
    return %arg1, %arg0, %c0_i32 : i32, i32, i32
  }
  func.func @transform_1(%arg0: i32, %arg1: i32) -> (i32, i32) {
    %c0_i32 = arith.constant 0 : i32
    %c0_i32_0 = arith.constant 0 : i32
    %c0_i32_1 = arith.constant 0 : i32
    return %c0_i32, %c0_i32_0 : i32, i32
  }
  func.func @transform_2(%arg0: i32, %arg1: i32) -> (i32, i32, i32) {
    %c0_i32 = arith.constant 0 : i32
    %c0_i32_0 = arith.constant 0 : i32
    return %arg1, %arg0, %c0_i32 : i32, i32, i32
  }
}

</mosaic_0001>

<llo_original>
// kernel: nnet_am_forward.6
$region0: #{nnet_am_forward.6}
  #allocation0 [shape = 'u32[]', space=smem, size = 0x4, offset = 0x4, fixed_abs, tag = 'smem constant byte address 0x4 - core index']
  #allocation1 [shape = 'u32[72,128]{1,0:T(1,128)}', space=vmem, size = 0x9000, scoped, tag = 'internal scratch']
  #allocation2 [shape = 'f32[8,32]{1,0:T(8,128)}', space=vmem, size = 0x1000, scoped, tag = 'scratch operand']
  #allocation3 [shape = 'f32[8,32]{1,0:T(8,128)}', space=vmem, size = 0x1000, scoped, tag = 'scratch operand']
  %s0 = inlined_call_operand.vmem [shape: f32[16,16,128], index: 0, kind: input, shape index: {}]
  %s1 = inlined_call_operand.vmem [shape: bf16[32,128], index: 1, kind: input, shape index: {}]
  %s2 = inlined_call_operand.vmem [shape: f32[16,16,32], index: 2, kind: output, shape index: {}]
  %s3 = sld [smem:[#allocation0]]
  $region45: #{nnet_am_forward.6} parent=0
    _
  %s5 = ssub.s32 1, %s3
  %s6 = scalar_select 0, %s5, %s3
  loop: start=0, step=1, limit=34
  $region2: #{nnet_am_forward.6} parent=0 // loop_pre_header
    _
  $region3: #{nnet_am_forward.6} parent=0 // loop_header
    %s8 = sphi 0, %s12
    %p9 = scmp.ge.s32.totalorder %s8, 34
    %s15 = sphi 0, %s27
    %s16 = sphi 0, %s23
    %s17 = sphi 0, %s15
    %s18 = sphi 0, %s16
    %s19 = sphi 0, %s17
    %s20 = sphi 0, %s18
    %s32 = sphi 0, %s34
    %s35 = sphi 0, %s32
    %s36 = sphi 0, %s35
    %s52 = sphi 0, %s36
    %s56 = sphi 0, %s56
    %s58 = sphi 0, %s56
    %s59 = sphi 0, %s58
    %s73 = sphi 0, %s59
    %s81 = sphi 0, %s83
    %s84 = sphi 0, %s81
    %s85 = sphi 0, %s84
    %s101 = sphi 0, %s85
  $region4: #{nnet_am_forward.6} parent=0 // loop_header_branch
    %11 = sbr.rel (%p9) target = $region8
  $region5: #{nnet_am_forward.6} parent=0 // loop_body
    %s13 = ssub.s32 %s8, 1
    %s14 = ssub.s32 %s8, 2
    %s21 = sadd.s32 1, %s16
    %p22 = scmp.ge.s32.totalorder %s21, 16
    %s23 = scalar_select %p22, 0, %s21
    %s24 = sadd.s32 1, %s15
    %s25 = scalar_select %p22, %s24, %s15
    %p26 = scmp.ge.s32.totalorder %s25, 2
    %s27 = scalar_select %p26, 0, %s25
    %s28 = ssub.s32 %s16, %s23
    %s29 = ssub.s32 %s15, %s27
    %s30 = sor.u32 %s28, %s29
    %p31 = scmp.eq.s32.totalorder %s30, 0
    %s33 = sadd.s32 %s32, 1
    %s34 = scalar_select %p31, %s32, %s33
    %p37 = pneg %p31
    %p38 = scmp.eq.s32.totalorder %s8, 31
    %p39 = por %p37, %p38
    %p40 = scmp.ne.s32.totalorder %s32, %s35
    %p41 = scmp.eq.s32.totalorder %s8, 0
    %p42 = por %p40, %p41
    %p43 = scmp.ne.s32.totalorder %s32, %s35
    %p44 = scmp.eq.s32.totalorder %s13, 31
    %p45 = por %p43, %p44
    %p46 = scmp.ne.s32.totalorder %s35, %s36
    %p47 = scmp.eq.s32.totalorder %s13, 0
    %p48 = por %p46, %p47
    %p49 = scmp.ne.s32.totalorder %s35, %s36
    %p50 = scmp.eq.s32.totalorder %s14, 31
    %p51 = por %p49, %p50
    %p53 = scmp.ne.s32.totalorder %s36, %s52
    %p54 = scmp.eq.s32.totalorder %s14, 0
    %p55 = por %p53, %p54
    %s57 = sadd.s32 %s56, 1
    %p60 = scmp.eq.s32.totalorder %s8, 31
    %p61 = scmp.ne.s32.totalorder %s56, %s58
    %p62 = scmp.eq.s32.totalorder %s8, 0
    %p63 = por %p61, %p62
    %p64 = scmp.ne.s32.totalorder %s56, %s58
    %p65 = scmp.eq.s32.totalorder %s13, 31
    %p66 = por %p64, %p65
    %p67 = scmp.ne.s32.totalorder %s58, %s59
    %p68 = scmp.eq.s32.totalorder %s13, 0
    %p69 = por %p67, %p68
    %p70 = scmp.ne.s32.totalorder %s58, %s59
    %p71 = scmp.eq.s32.totalorder %s14, 31
    %p72 = por %p70, %p71
    %p74 = scmp.ne.s32.totalorder %s59, %s73
    %p75 = scmp.eq.s32.totalorder %s14, 0
    %p76 = por %p74, %p75
    %s77 = ssub.s32 %s16, %s23
    %s78 = ssub.s32 %s15, %s27
    %s79 = sor.u32 %s77, %s78
    %p80 = scmp.eq.s32.totalorder %s79, 0
    %s82 = sadd.s32 %s81, 1
    %s83 = scalar_select %p80, %s81, %s82
    %p86 = pneg %p80
    %p87 = scmp.eq.s32.totalorder %s8, 31
    %p88 = por %p86, %p87
    %p89 = scmp.ne.s32.totalorder %s81, %s84
    %p90 = scmp.eq.s32.totalorder %s8, 0
    %p91 = por %p89, %p90
    %p92 = scmp.ne.s32.totalorder %s81, %s84
    %p93 = scmp.eq.s32.totalorder %s13, 31
    %p94 = por %p92, %p93
    %p95 = scmp.ne.s32.totalorder %s84, %s85
    %p96 = scmp.eq.s32.totalorder %s13, 0
    %p97 = por %p95, %p96
    %p98 = scmp.ne.s32.totalorder %s84, %s85
    %p99 = scmp.eq.s32.totalorder %s14, 31
    %p100 = por %p98, %p99
    %p102 = scmp.ne.s32.totalorder %s85, %s101
    %p103 = scmp.eq.s32.totalorder %s14, 0
    %p104 = por %p102, %p103
    %p105 = scmp.le.s32.totalorder 1, %s8
    %p106 = scmp.lt.s32.totalorder %s8, 33
    %p107 = pnand %p105, %p106
    %p108 = pneg %p107
    // Predicated region
    $region9: #{nnet_am_forward.6} parent=5 // pred_check
      _
    $region10: #{nnet_am_forward.6} parent=5 // pred_check_branch
      %110 = sbr.rel (%p107) target = $region12
    $region11: #{nnet_am_forward.6} parent=5 // pred_region
      %s111 = ssub.s32 %s8, 1
      // Predicated region
      $region13: #{nnet_am_forward.6} parent=11 // pred_check
        %p112 = pneg %p69
      $region14: #{nnet_am_forward.6} parent=11 // pred_check_branch
        %114 = sbr.rel (%p112) target = $region16
      $region15: #{nnet_am_forward.6} parent=11 // pred_region
        _
      $region16: #{nnet_am_forward.6} parent=11 // pred_fallthru
        _
    $region12: #{nnet_am_forward.6} parent=5 // pred_fallthru
      _
    %p115 = scmp.lt.s32.totalorder %s8, 32
    // Predicated region
    $region17: #{nnet_am_forward.6} parent=5 // pred_check
      %p116 = pneg %p115
    $region18: #{nnet_am_forward.6} parent=5 // pred_check_branch
      %118 = sbr.rel (%p116) target = $region20
    $region19: #{nnet_am_forward.6} parent=5 // pred_region
      // Predicated region
      $region21: #{nnet_am_forward.6} parent=19 // pred_check
        %p119 = pneg %p42
      $region22: #{nnet_am_forward.6} parent=19 // pred_check_branch
        %121 = sbr.rel (%p119) target = $region24
      $region23: #{nnet_am_forward.6} parent=19 // pred_region
        %p122 = scmp.lt.s32.totalorder %s16, 15
        %s123 = scalar_select %p122, %s16, 15
        %p124 = scmp.lt.s32.totalorder %s15, 1
        %s125 = scalar_select %p124, %s15, 1
        %s126 = smul.addr %s123, 2
        %s127 = sadd.s32 %s125, %s126
        %s128 = smul.addr %s127, 8
        %s129 = scalar_lea.vmem %s0, %s128
      $region24: #{nnet_am_forward.6} parent=19 // pred_fallthru
        _
    $region20: #{nnet_am_forward.6} parent=5 // pred_fallthru
      _
    %p130 = scmp.le.s32.totalorder 1, %s8
    %p131 = scmp.lt.s32.totalorder %s8, 33
    %p132 = pnand %p130, %p131
    %p133 = pneg %p132
    // Predicated region
    $region25: #{nnet_am_forward.6} parent=5 // pred_check
      _
    $region26: #{nnet_am_forward.6} parent=5 // pred_check_branch
      %135 = sbr.rel (%p132) target = $region28
    $region27: #{nnet_am_forward.6} parent=5 // pred_region
      %s136 = ssub.s32 %s8, 1
      %p137 = scmp.lt.s32.totalorder %s18, 15
      %s138 = scalar_select %p137, %s18, 15
      %p139 = scmp.lt.s32.totalorder %s17, 1
      %s140 = scalar_select %p139, %s17, 1
      %s141 = smul.addr %s138, 2
      %s142 = sadd.s32 %s140, %s141
      %s143 = smul.addr %s142, 8
      %s144 = scalar_lea.vmem %s0, %s143
      %p145 = pneg %p48
      %p146 = pneg %p45
      %p147 = pneg %p69
      %p148 = pneg %p66
      %p149 = pneg %p97
      %p150 = pneg %p94
      %p151 = scmp.lt.s32.totalorder %s18, 15
      %s152 = scalar_select %p151, %s18, 15
      %p153 = scmp.lt.s32.totalorder %s17, 1
      %s154 = scalar_select %p153, %s17, 1
      %s155 = smul.addr %s152, 2
      %s156 = sadd.s32 %s154, %s155
      %s157 = smul.addr %s156, 8
      %s158 = scalar_lea.vmem %s2, %s157
      %p159 = scmp.lt.s32.totalorder %s18, 15
      %s160 = scalar_select %p159, %s18, 15
      %p161 = scmp.lt.s32.totalorder %s17, 1
      %s162 = scalar_select %p161, %s17, 1
      %s163 = smul.addr %s160, 2
      %s164 = sadd.s32 %s162, %s163
      %s165 = smul.addr %s164, 8
      %s166 = scalar_lea.vmem %s0, %s165
      %p167 = scmp.lt.s32.totalorder %s18, 15
      %s168 = scalar_select %p167, %s18, 15
      %p169 = scmp.lt.s32.totalorder %s17, 1
      %s170 = scalar_select %p169, %s17, 1
      %s171 = smul.addr %s168, 2
      %s172 = sadd.s32 %s170, %s171
      %s173 = smul.addr %s172, 8
      %s174 = scalar_lea.vmem %s2, %s173
      %p176 = scmp.eq.s32.totalorder %s18, 0
      // Predicated region
      $region29: #{nnet_am_forward.6} parent=27 // pred_check
        %p177 = pneg %p176
      $region30: #{nnet_am_forward.6} parent=27 // pred_check_branch
        %179 = sbr.rel (%p177) target = $region32
      $region31: #{nnet_am_forward.6} parent=27 // pred_region
        %vm180 = vcmask 261120
        %181 = vst.msk [vmem:[#allocation2] sm:$0xff] %vm180, 0.0
        %182 = vst.msk [vmem:[#allocation3] sm:$0xff] %vm180, 0.0
      $region32: #{nnet_am_forward.6} parent=27 // pred_fallthru
        _
      %v183 = vld [vmem:[%s166] sm:$0xff]
      %v184 = vld [vmem:[#allocation2] sm:$0xff]
      %v185 = vpack.c.bf16 %v184, %v184
      %v186 = vld [vmem:[%s1] sm:$0xf]
      %v187 = vld [vmem:[%s1 + $0x4] sm:$0xf]
      %v188 = vld [vmem:[%s1 + $0x8] sm:$0xf]
      %v189 = vld [vmem:[%s1 + $0xc] sm:$0xf]
      %v194 = vunpack.c.l.b16 %v186
      %v195 = vunpack.c.l.b16 %v187
      %v196 = vunpack.c.l.b16 %v188
      %v197 = vunpack.c.l.b16 %v189
      %v198 = vpack.c.b16 %v195, %v194
      %v199 = vpack.c.b16 %v197, %v196
      %vm202 = vcmask 261120
      %v204 = vsel %vm202, %v185, 0
      %206 = vmatpush.bf16.msra.mxu0 0
      %207 = vmatpush.bf16.msra.mxu0 0
      %208 = vmatpush.bf16.msra.mxu0 0
      %209 = vmatpush.bf16.msra.mxu0 0
      %210 = vmatpush.bf16.msra.mxu0 0
      %211 = vmatpush.bf16.msra.mxu0 0
      %212 = vmatpush.bf16.msra.mxu0 %v199
      %213 = vmatpush.bf16.msra.mxu0 %v198
      %214 = vmatmul.bf16.gmra.mxu0 %v204
      %v215 = vpop.f32.mrf.mxu0
      %v216 = vadd.f32 0.0, %v215
      %v217 = vpop.f32.mrf.mxu0
      %218 = vdwg.mxu0
      %v219 = vadd.f32 %v183, %v216
      %v220 = vxor.u32 %v219, 2147483648
      %v221 = vmul.f32 %v220, 1.442695
      %v222 = vpow.pop %v221
      %v223 = vadd.f32 %v222, 1.0
      %v224 = vrcp.pop %v223
      %v225 = vmul.f32 %v223, %v224
      %v226 = vsub.f32 1.0, %v225
      %v227 = vmul.f32 %v224, %v226
      %v228 = vadd.f32 %v224, %v227
      %vm229 = vweird.f32 %v223
      %vm230 = vweird.f32 %v224
      %vm231 = vmor %vm229, %vm230
      %v232 = vsel %vm231, %v224, %v228
      %v233 = vand.u32 2147483647, %v223
      %vm234 = vcmp.eq.f32.partialorder %v233, 8.507059e+37
      %v235 = vand.u32 %v223, 2147483648
      %v236 = vor.u32 1.1754944e-38, %v235
      %v237 = vsel %vm234, %v236, %v232
      %v238 = vmul.f32 1.0, %v237
      %v239 = vtanh.pop %v219
      %v240 = vld [vmem:[#allocation3] sm:$0xff]
      %242 = vrot.lane.b32.xlu0 %v240, 32
      %v243 = vpop.permute.xlu0 %242
      %v245 = vmul.f32 %v238, %v243
      %247 = vrot.lane.b32.xlu0 %v239, 64
      %v248 = vpop.permute.xlu0 %247
      %v250 = vmul.f32 %v238, %v248
      %252 = vrot.lane.b32.xlu0 %v250, 32
      %v253 = vpop.permute.xlu0 %252
      %v255 = vadd.f32 %v245, %v253
      %v256 = vtanh.pop %v255
      %258 = vrot.lane.b32.xlu0 %v256, 64
      %v259 = vpop.permute.xlu0 %258
      %v261 = vmul.f32 %v238, %v259
      %263 = vrot.lane.b32.xlu0 %v255, 96
      %v264 = vpop.permute.xlu0 %263
      %266 = vst.msk [vmem:[#allocation3] sm:$0xff] %vm202, %v264
      %268 = vrot.lane.b32.xlu0 %v261, 32
      %v269 = vpop.permute.xlu0 %268
      %271 = vst.msk [vmem:[#allocation2] sm:$0xff] %vm202, %v269
      %272 = vst.msk [vmem:[%s174] sm:$0xff] %vm202, %v269
      %p273 = scmp.lt.s32.totalorder %s18, 15
      %s274 = scalar_select %p273, %s18, 15
      %p275 = scmp.lt.s32.totalorder %s17, 1
      %s276 = scalar_select %p275, %s17, 1
      %s277 = smul.addr %s274, 2
      %s278 = sadd.s32 %s276, %s277
      %s279 = smul.addr %s278, 8
      %s280 = scalar_lea.vmem %s2, %s279
      // Predicated region
      $region33: #{nnet_am_forward.6} parent=27 // pred_check
        %p281 = pneg %p94
      $region34: #{nnet_am_forward.6} parent=27 // pred_check_branch
        %283 = sbr.rel (%p281) target = $region36
      $region35: #{nnet_am_forward.6} parent=27 // pred_region
        _
      $region36: #{nnet_am_forward.6} parent=27 // pred_fallthru
        _
    $region28: #{nnet_am_forward.6} parent=5 // pred_fallthru
      _
    %p284 = scmp.le.s32.totalorder 2, %s8
    // Predicated region
    $region37: #{nnet_am_forward.6} parent=5 // pred_check
      %p285 = pneg %p284
    $region38: #{nnet_am_forward.6} parent=5 // pred_check_branch
      %287 = sbr.rel (%p285) target = $region40
    $region39: #{nnet_am_forward.6} parent=5 // pred_region
      %s288 = ssub.s32 %s8, 2
      // Predicated region
      $region41: #{nnet_am_forward.6} parent=39 // pred_check
        %p289 = pneg %p100
      $region42: #{nnet_am_forward.6} parent=39 // pred_check_branch
        %291 = sbr.rel (%p289) target = $region44
      $region43: #{nnet_am_forward.6} parent=39 // pred_region
        %p292 = scmp.lt.s32.totalorder %s20, 15
        %s293 = scalar_select %p292, %s20, 15
        %p294 = scmp.lt.s32.totalorder %s19, 1
        %s295 = scalar_select %p294, %s19, 1
        %s296 = smul.addr %s293, 2
        %s297 = sadd.s32 %s295, %s296
        %s298 = smul.addr %s297, 8
        %s299 = scalar_lea.vmem %s2, %s298
      $region44: #{nnet_am_forward.6} parent=39 // pred_fallthru
        _
    $region40: #{nnet_am_forward.6} parent=5 // pred_fallthru
      _
  $region6: #{nnet_am_forward.6} parent=0 // loop_footer
    %s12 = sadd.s32 1, %s8
  $region7: #{nnet_am_forward.6} parent=0 // loop_footer_branch
    %7 = sbr.rel target = $region3
  $region8: #{nnet_am_forward.6} parent=0 // loop_exit
    _

// kernel: nnet_am_forward.5
$region0: #{nnet_am_forward.5}
  #allocation0 [shape = 'u32[]', space=smem, size = 0x4, offset = 0x4, fixed_abs, tag = 'smem constant byte address 0x4 - core index']
  #allocation1 [shape = 'u32[72,128]{1,0:T(1,128)}', space=vmem, size = 0x9000, scoped, tag = 'internal scratch']
  #allocation2 [shape = 'f32[256,128]{1,0:T(8,128)}', space=vmem, size = 0x20000, scoped, tag = 'scratch operand']
  %s0 = inlined_call_operand.vmem [shape: bf16[256,128], index: 0, kind: input, shape index: {}]
  %s1 = inlined_call_operand.vmem [shape: bf16[128,128], index: 1, kind: input, shape index: {}]
  %s2 = inlined_call_operand.vmem [shape: f32[1,128], index: 2, kind: input, shape index: {}]
  %s3 = inlined_call_operand.vmem [shape: f32[256,128], index: 3, kind: output, shape index: {}]
  %s4 = sld [smem:[#allocation0]]
  $region30: #{nnet_am_forward.5} parent=0
    _
  %s6 = ssub.s32 1, %s4
  %s7 = scalar_select 0, %s6, %s4
  // Predicated region
  $region2: #{nnet_am_forward.5} parent=0 // pred_check
    _
  $region3: #{nnet_am_forward.5} parent=0 // pred_check_branch
    %9 = sbr.rel (0) target = $region5
  $region4: #{nnet_am_forward.5} parent=0 // pred_region
    _
  $region5: #{nnet_am_forward.5} parent=0 // pred_fallthru
    _
  // Predicated region
  $region6: #{nnet_am_forward.5} parent=0 // pred_check
    _
  $region7: #{nnet_am_forward.5} parent=0 // pred_check_branch
    %11 = sbr.rel (0) target = $region9
  $region8: #{nnet_am_forward.5} parent=0 // pred_region
    _
  $region9: #{nnet_am_forward.5} parent=0 // pred_fallthru
    _
  // Predicated region
  $region10: #{nnet_am_forward.5} parent=0 // pred_check
    _
  $region11: #{nnet_am_forward.5} parent=0 // pred_check_branch
    %13 = sbr.rel (0) target = $region13
  $region12: #{nnet_am_forward.5} parent=0 // pred_region
    _
  $region13: #{nnet_am_forward.5} parent=0 // pred_fallthru
    _
  %p14 = scmp.eq.s32.totalorder 0, 0
  // Predicated region
  $region14: #{nnet_am_forward.5} parent=0 // pred_check
    %p15 = pneg %p14
  $region15: #{nnet_am_forward.5} parent=0 // pred_check_branch
    %17 = sbr.rel (%p15) target = $region17
  $region16: #{nnet_am_forward.5} parent=0 // pred_region
    %18 = vst [vmem:[#allocation2] sm:$0xff] 0.0
    %19 = vst [vmem:[#allocation2 + $0x8] sm:$0xff] 0.0
    %20 = vst [vmem:[#allocation2 + $0x10] sm:$0xff] 0.0
    %21 = vst [vmem:[#allocation2 + $0x18] sm:$0xff] 0.0
    %22 = vst [vmem:[#allocation2 + $0x20] sm:$0xff] 0.0
    %23 = vst [vmem:[#allocation2 + $0x28] sm:$0xff] 0.0
    %24 = vst [vmem:[#allocation2 + $0x30] sm:$0xff] 0.0
    %25 = vst [vmem:[#allocation2 + $0x38] sm:$0xff] 0.0
    %26 = vst [vmem:[#allocation2 + $0x40] sm:$0xff] 0.0
    %27 = vst [vmem:[#allocation2 + $0x48] sm:$0xff] 0.0
    %28 = vst [vmem:[#allocation2 + $0x50] sm:$0xff] 0.0
    %29 = vst [vmem:[#allocation2 + $0x58] sm:$0xff] 0.0
    %30 = vst [vmem:[#allocation2 + $0x60] sm:$0xff] 0.0
    %31 = vst [vmem:[#allocation2 + $0x68] sm:$0xff] 0.0
    %32 = vst [vmem:[#allocation2 + $0x70] sm:$0xff] 0.0
    %33 = vst [vmem:[#allocation2 + $0x78] sm:$0xff] 0.0
    %34 = vst [vmem:[#allocation2 + $0x80] sm:$0xff] 0.0
    %35 = vst [vmem:[#allocation2 + $0x88] sm:$0xff] 0.0
    %36 = vst [vmem:[#allocation2 + $0x90] sm:$0xff] 0.0
    %37 = vst [vmem:[#allocation2 + $0x98] sm:$0xff] 0.0
    %38 = vst [vmem:[#allocation2 + $0xa0] sm:$0xff] 0.0
    %39 = vst [vmem:[#allocation2 + $0xa8] sm:$0xff] 0.0
    %40 = vst [vmem:[#allocation2 + $0xb0] sm:$0xff] 0.0
    %41 = vst [vmem:[#allocation2 + $0xb8] sm:$0xff] 0.0
    %42 = vst [vmem:[#allocation2 + $0xc0] sm:$0xff] 0.0
    %43 = vst [vmem:[#allocation2 + $0xc8] sm:$0xff] 0.0
    %44 = vst [vmem:[#allocation2 + $0xd0] sm:$0xff] 0.0
    %45 = vst [vmem:[#allocation2 + $0xd8] sm:$0xff] 0.0
    %46 = vst [vmem:[#allocation2 + $0xe0] sm:$0xff] 0.0
    %47 = vst [vmem:[#allocation2 + $0xe8] sm:$0xff] 0.0
    %48 = vst [vmem:[#allocation2 + $0xf0] sm:$0xff] 0.0
    %49 = vst [vmem:[#allocation2 + $0xf8] sm:$0xff] 0.0
  $region17: #{nnet_am_forward.5} parent=0 // pred_fallthru
    _
  %v50 = vld [vmem:[#allocation2] sm:$0xff]
  %v51 = vld [vmem:[#allocation2 + $0x8] sm:$0xff]
  %v52 = vld [vmem:[#allocation2 + $0x10] sm:$0xff]
  %v53 = vld [vmem:[#allocation2 + $0x18] sm:$0xff]
  %v54 = vld [vmem:[#allocation2 + $0x20] sm:$0xff]
  %v55 = vld [vmem:[#allocation2 + $0x28] sm:$0xff]
  %v56 = vld [vmem:[#allocation2 + $0x30] sm:$0xff]
  %v57 = vld [vmem:[#allocation2 + $0x38] sm:$0xff]
  %v58 = vld [vmem:[#allocation2 + $0x40] sm:$0xff]
  %v59 = vld [vmem:[#allocation2 + $0x48] sm:$0xff]
  %v60 = vld [vmem:[#allocation2 + $0x50] sm:$0xff]
  %v61 = vld [vmem:[#allocation2 + $0x58] sm:$0xff]
  %v62 = vld [vmem:[#allocation2 + $0x60] sm:$0xff]
  %v63 = vld [vmem:[#allocation2 + $0x68] sm:$0xff]
  %v64 = vld [vmem:[#allocation2 + $0x70] sm:$0xff]
  %v65 = vld [vmem:[#allocation2 + $0x78] sm:$0xff]
  %v66 = vld [vmem:[#allocation2 + $0x80] sm:$0xff]
  %v67 = vld [vmem:[#allocation2 + $0x88] sm:$0xff]
  %v68 = vld [vmem:[#allocation2 + $0x90] sm:$0xff]
  %v69 = vld [vmem:[#allocation2 + $0x98] sm:$0xff]
  %v70 = vld [vmem:[#allocation2 + $0xa0] sm:$0xff]
  %v71 = vld [vmem:[#allocation2 + $0xa8] sm:$0xff]
  %v72 = vld [vmem:[#allocation2 + $0xb0] sm:$0xff]
  %v73 = vld [vmem:[#allocation2 + $0xb8] sm:$0xff]
  %v74 = vld [vmem:[#allocation2 + $0xc0] sm:$0xff]
  %v75 = vld [vmem:[#allocation2 + $0xc8] sm:$0xff]
  %v76 = vld [vmem:[#allocation2 + $0xd0] sm:$0xff]
  %v77 = vld [vmem:[#allocation2 + $0xd8] sm:$0xff]
  %v78 = vld [vmem:[#allocation2 + $0xe0] sm:$0xff]
  %v79 = vld [vmem:[#allocation2 + $0xe8] sm:$0xff]
  %v80 = vld [vmem:[#allocation2 + $0xf0] sm:$0xff]
  %v81 = vld [vmem:[#allocation2 + $0xf8] sm:$0xff]
  %v82 = vld [vmem:[%s0] sm:$0xf]
  %v83 = vld [vmem:[%s0 + $0x4] sm:$0xf]
  %v84 = vld [vmem:[%s0 + $0x8] sm:$0xf]
  %v85 = vld [vmem:[%s0 + $0xc] sm:$0xf]
  %v86 = vld [vmem:[%s0 + $0x10] sm:$0xf]
  %v87 = vld [vmem:[%s0 + $0x14] sm:$0xf]
  %v88 = vld [vmem:[%s0 + $0x18] sm:$0xf]
  %v89 = vld [vmem:[%s0 + $0x1c] sm:$0xf]
  %v90 = vld [vmem:[%s0 + $0x20] sm:$0xf]
  %v91 = vld [vmem:[%s0 + $0x24] sm:$0xf]
  %v92 = vld [vmem:[%s0 + $0x28] sm:$0xf]
  %v93 = vld [vmem:[%s0 + $0x2c] sm:$0xf]
  %v94 = vld [vmem:[%s0 + $0x30] sm:$0xf]
  %v95 = vld [vmem:[%s0 + $0x34] sm:$0xf]
  %v96 = vld [vmem:[%s0 + $0x38] sm:$0xf]
  %v97 = vld [vmem:[%s0 + $0x3c] sm:$0xf]
  %v98 = vld [vmem:[%s0 + $0x40] sm:$0xf]
  %v99 = vld [vmem:[%s0 + $0x44] sm:$0xf]
  %v100 = vld [vmem:[%s0 + $0x48] sm:$0xf]
  %v101 = vld [vmem:[%s0 + $0x4c] sm:$0xf]
  %v102 = vld [vmem:[%s0 + $0x50] sm:$0xf]
  %v103 = vld [vmem:[%s0 + $0x54] sm:$0xf]
  %v104 = vld [vmem:[%s0 + $0x58] sm:$0xf]
  %v105 = vld [vmem:[%s0 + $0x5c] sm:$0xf]
  %v106 = vld [vmem:[%s0 + $0x60] sm:$0xf]
  %v107 = vld [vmem:[%s0 + $0x64] sm:$0xf]
  %v108 = vld [vmem:[%s0 + $0x68] sm:$0xf]
  %v109 = vld [vmem:[%s0 + $0x6c] sm:$0xf]
  %v110 = vld [vmem:[%s0 + $0x70] sm:$0xf]
  %v111 = vld [vmem:[%s0 + $0x74] sm:$0xf]
  %v112 = vld [vmem:[%s0 + $0x78] sm:$0xf]
  %v113 = vld [vmem:[%s0 + $0x7c] sm:$0xf]
  %v114 = vld [vmem:[%s1] sm:$0xf]
  %v115 = vld [vmem:[%s1 + $0x4] sm:$0xf]
  %v116 = vld [vmem:[%s1 + $0x8] sm:$0xf]
  %v117 = vld [vmem:[%s1 + $0xc] sm:$0xf]
  %v118 = vld [vmem:[%s1 + $0x10] sm:$0xf]
  %v119 = vld [vmem:[%s1 + $0x14] sm:$0xf]
  %v120 = vld [vmem:[%s1 + $0x18] sm:$0xf]
  %v121 = vld [vmem:[%s1 + $0x1c] sm:$0xf]
  %v122 = vld [vmem:[%s1 + $0x20] sm:$0xf]
  %v123 = vld [vmem:[%s1 + $0x24] sm:$0xf]
  %v124 = vld [vmem:[%s1 + $0x28] sm:$0xf]
  %v125 = vld [vmem:[%s1 + $0x2c] sm:$0xf]
  %v126 = vld [vmem:[%s1 + $0x30] sm:$0xf]
  %v127 = vld [vmem:[%s1 + $0x34] sm:$0xf]
  %v128 = vld [vmem:[%s1 + $0x38] sm:$0xf]
  %v129 = vld [vmem:[%s1 + $0x3c] sm:$0xf]
  %v162 = vunpack.c.l.b16 %v82
  %v163 = vunpack.c.l.b16 %v83
  %v164 = vunpack.c.l.b16 %v84
  %v165 = vunpack.c.l.b16 %v85
  %v166 = vunpack.c.l.b16 %v86
  %v167 = vunpack.c.l.b16 %v87
  %v168 = vunpack.c.l.b16 %v88
  %v169 = vunpack.c.l.b16 %v89
  %v170 = vunpack.c.l.b16 %v90
  %v171 = vunpack.c.l.b16 %v91
  %v172 = vunpack.c.l.b16 %v92
  %v173 = vunpack.c.l.b16 %v93
  %v174 = vunpack.c.l.b16 %v94
  %v175 = vunpack.c.l.b16 %v95
  %v176 = vunpack.c.l.b16 %v96
  %v177 = vunpack.c.l.b16 %v97
  %v178 = vunpack.c.l.b16 %v98
  %v179 = vunpack.c.l.b16 %v99
  %v180 = vunpack.c.l.b16 %v100
  %v181 = vunpack.c.l.b16 %v101
  %v182 = vunpack.c.l.b16 %v102
  %v183 = vunpack.c.l.b16 %v103
  %v184 = vunpack.c.l.b16 %v104
  %v185 = vunpack.c.l.b16 %v105
  %v186 = vunpack.c.l.b16 %v106
  %v187 = vunpack.c.l.b16 %v107
  %v188 = vunpack.c.l.b16 %v108
  %v189 = vunpack.c.l.b16 %v109
  %v190 = vunpack.c.l.b16 %v110
  %v191 = vunpack.c.l.b16 %v111
  %v192 = vunpack.c.l.b16 %v112
  %v193 = vunpack.c.l.b16 %v113
  %v194 = vpack.c.b16 %v163, %v162
  %v195 = vpack.c.b16 %v165, %v164
  %v196 = vpack.c.b16 %v167, %v166
  %v197 = vpack.c.b16 %v169, %v168
  %v198 = vpack.c.b16 %v171, %v170
  %v199 = vpack.c.b16 %v173, %v172
  %v200 = vpack.c.b16 %v175, %v174
  %v201 = vpack.c.b16 %v177, %v176
  %v202 = vpack.c.b16 %v179, %v178
  %v203 = vpack.c.b16 %v181, %v180
  %v204 = vpack.c.b16 %v183, %v182
  %v205 = vpack.c.b16 %v185, %v184
  %v206 = vpack.c.b16 %v187, %v186
  %v207 = vpack.c.b16 %v189, %v188
  %v208 = vpack.c.b16 %v191, %v190
  %v209 = vpack.c.b16 %v193, %v192
  %v242 = vunpack.c.l.b16 %v114
  %v243 = vunpack.c.l.b16 %v115
  %v244 = vunpack.c.l.b16 %v116
  %v245 = vunpack.c.l.b16 %v117
  %v246 = vunpack.c.l.b16 %v118
  %v247 = vunpack.c.l.b16 %v119
  %v248 = vunpack.c.l.b16 %v120
  %v249 = vunpack.c.l.b16 %v121
  %v250 = vunpack.c.l.b16 %v122
  %v251 = vunpack.c.l.b16 %v123
  %v252 = vunpack.c.l.b16 %v124
  %v253 = vunpack.c.l.b16 %v125
  %v254 = vunpack.c.l.b16 %v126
  %v255 = vunpack.c.l.b16 %v127
  %v256 = vunpack.c.l.b16 %v128
  %v257 = vunpack.c.l.b16 %v129
  %v258 = vpack.c.b16 %v243, %v242
  %v259 = vpack.c.b16 %v245, %v244
  %v260 = vpack.c.b16 %v247, %v246
  %v261 = vpack.c.b16 %v249, %v248
  %v262 = vpack.c.b16 %v251, %v250
  %v263 = vpack.c.b16 %v253, %v252
  %v264 = vpack.c.b16 %v255, %v254
  %v265 = vpack.c.b16 %v257, %v256
  %274 = vmatpush.bf16.msra.mxu0 %v265
  %275 = vmatpush.bf16.msra.mxu0 %v264
  %276 = vmatpush.bf16.msra.mxu0 %v263
  %277 = vmatpush.bf16.msra.mxu0 %v262
  %278 = vmatpush.bf16.msra.mxu0 %v261
  %279 = vmatpush.bf16.msra.mxu0 %v260
  %280 = vmatpush.bf16.msra.mxu0 %v259
  %281 = vmatpush.bf16.msra.mxu0 %v258
  %282 = vmatmul.bf16.gmra.mxu0 %v194
  %v283 = vpop.f32.mrf.mxu0
  %v284 = vadd.f32 0.0, %v283
  %v285 = vpop.f32.mrf.mxu0
  %v286 = vadd.f32 0.0, %v285
  %287 = vmatmul.bf16.gmra.mxu0 %v195
  %v288 = vpop.f32.mrf.mxu0
  %v289 = vadd.f32 0.0, %v288
  %v290 = vpop.f32.mrf.mxu0
  %v291 = vadd.f32 0.0, %v290
  %292 = vmatmul.bf16.gmra.mxu0 %v196
  %v293 = vpop.f32.mrf.mxu0
  %v294 = vadd.f32 0.0, %v293
  %v295 = vpop.f32.mrf.mxu0
  %v296 = vadd.f32 0.0, %v295
  %297 = vmatmul.bf16.gmra.mxu0 %v197
  %v298 = vpop.f32.mrf.mxu0
  %v299 = vadd.f32 0.0, %v298
  %v300 = vpop.f32.mrf.mxu0
  %v301 = vadd.f32 0.0, %v300
  %302 = vmatmul.bf16.gmra.mxu0 %v198
  %v303 = vpop.f32.mrf.mxu0
  %v304 = vadd.f32 0.0, %v303
  %v305 = vpop.f32.mrf.mxu0
  %v306 = vadd.f32 0.0, %v305
  %307 = vmatmul.bf16.gmra.mxu0 %v199
  %v308 = vpop.f32.mrf.mxu0
  %v309 = vadd.f32 0.0, %v308
  %v310 = vpop.f32.mrf.mxu0
  %v311 = vadd.f32 0.0, %v310
  %312 = vmatmul.bf16.gmra.mxu0 %v200
  %v313 = vpop.f32.mrf.mxu0
  %v314 = vadd.f32 0.0, %v313
  %v315 = vpop.f32.mrf.mxu0
  %v316 = vadd.f32 0.0, %v315
  %317 = vmatmul.bf16.gmra.mxu0 %v201
  %v318 = vpop.f32.mrf.mxu0
  %v319 = vadd.f32 0.0, %v318
  %v320 = vpop.f32.mrf.mxu0
  %v321 = vadd.f32 0.0, %v320
  %322 = vmatmul.bf16.gmra.mxu0 %v202
  %v323 = vpop.f32.mrf.mxu0
  %v324 = vadd.f32 0.0, %v323
  %v325 = vpop.f32.mrf.mxu0
  %v326 = vadd.f32 0.0, %v325
  %327 = vmatmul.bf16.gmra.mxu0 %v203
  %v328 = vpop.f32.mrf.mxu0
  %v329 = vadd.f32 0.0, %v328
  %v330 = vpop.f32.mrf.mxu0
  %v331 = vadd.f32 0.0, %v330
  %332 = vmatmul.bf16.gmra.mxu0 %v204
  %v333 = vpop.f32.mrf.mxu0
  %v334 = vadd.f32 0.0, %v333
  %v335 = vpop.f32.mrf.mxu0
  %v336 = vadd.f32 0.0, %v335
  %337 = vmatmul.bf16.gmra.mxu0 %v205
  %v338 = vpop.f32.mrf.mxu0
  %v339 = vadd.f32 0.0, %v338
  %v340 = vpop.f32.mrf.mxu0
  %v341 = vadd.f32 0.0, %v340
  %342 = vmatmul.bf16.gmra.mxu0 %v206
  %v343 = vpop.f32.mrf.mxu0
  %v344 = vadd.f32 0.0, %v343
  %v345 = vpop.f32.mrf.mxu0
  %v346 = vadd.f32 0.0, %v345
  %347 = vmatmul.bf16.gmra.mxu0 %v207
  %v348 = vpop.f32.mrf.mxu0
  %v349 = vadd.f32 0.0, %v348
  %v350 = vpop.f32.mrf.mxu0
  %v351 = vadd.f32 0.0, %v350
  %352 = vmatmul.bf16.gmra.mxu0 %v208
  %v353 = vpop.f32.mrf.mxu0
  %v354 = vadd.f32 0.0, %v353
  %v355 = vpop.f32.mrf.mxu0
  %v356 = vadd.f32 0.0, %v355
  %357 = vmatmul.bf16.gmra.mxu0 %v209
  %v358 = vpop.f32.mrf.mxu0
  %v359 = vadd.f32 0.0, %v358
  %v360 = vpop.f32.mrf.mxu0
  %v361 = vadd.f32 0.0, %v360
  %362 = vdwg.mxu0
  %v363 = vadd.f32 %v50, %v284
  %v364 = vadd.f32 %v51, %v286
  %v365 = vadd.f32 %v52, %v289
  %v366 = vadd.f32 %v53, %v291
  %v367 = vadd.f32 %v54, %v294
  %v368 = vadd.f32 %v55, %v296
  %v369 = vadd.f32 %v56, %v299
  %v370 = vadd.f32 %v57, %v301
  %v371 = vadd.f32 %v58, %v304
  %v372 = vadd.f32 %v59, %v306
  %v373 = vadd.f32 %v60, %v309
  %v374 = vadd.f32 %v61, %v311
  %v375 = vadd.f32 %v62, %v314
  %v376 = vadd.f32 %v63, %v316
  %v377 = vadd.f32 %v64, %v319
  %v378 = vadd.f32 %v65, %v321
  %v379 = vadd.f32 %v66, %v324
  %v380 = vadd.f32 %v67, %v326
  %v381 = vadd.f32 %v68, %v329
  %v382 = vadd.f32 %v69, %v331
  %v383 = vadd.f32 %v70, %v334
  %v384 = vadd.f32 %v71, %v336
  %v385 = vadd.f32 %v72, %v339
  %v386 = vadd.f32 %v73, %v341
  %v387 = vadd.f32 %v74, %v344
  %v388 = vadd.f32 %v75, %v346
  %v389 = vadd.f32 %v76, %v349
  %v390 = vadd.f32 %v77, %v351
  %v391 = vadd.f32 %v78, %v354
  %v392 = vadd.f32 %v79, %v356
  %v393 = vadd.f32 %v80, %v359
  %v394 = vadd.f32 %v81, %v361
  %395 = vst [vmem:[#allocation2] sm:$0xff] %v363
  %396 = vst [vmem:[#allocation2 + $0x8] sm:$0xff] %v364
  %397 = vst [vmem:[#allocation2 + $0x10] sm:$0xff] %v365
  %398 = vst [vmem:[#allocation2 + $0x18] sm:$0xff] %v366
  %399 = vst [vmem:[#allocation2 + $0x20] sm:$0xff] %v367
  %400 = vst [vmem:[#allocation2 + $0x28] sm:$0xff] %v368
  %401 = vst [vmem:[#allocation2 + $0x30] sm:$0xff] %v369
  %402 = vst [vmem:[#allocation2 + $0x38] sm:$0xff] %v370
  %403 = vst [vmem:[#allocation2 + $0x40] sm:$0xff] %v371
  %404 = vst [vmem:[#allocation2 + $0x48] sm:$0xff] %v372
  %405 = vst [vmem:[#allocation2 + $0x50] sm:$0xff] %v373
  %406 = vst [vmem:[#allocation2 + $0x58] sm:$0xff] %v374
  %407 = vst [vmem:[#allocation2 + $0x60] sm:$0xff] %v375
  %408 = vst [vmem:[#allocation2 + $0x68] sm:$0xff] %v376
  %409 = vst [vmem:[#allocation2 + $0x70] sm:$0xff] %v377
  %410 = vst [vmem:[#allocation2 + $0x78] sm:$0xff] %v378
  %411 = vst [vmem:[#allocation2 + $0x80] sm:$0xff] %v379
  %412 = vst [vmem:[#allocation2 + $0x88] sm:$0xff] %v380
  %413 = vst [vmem:[#allocation2 + $0x90] sm:$0xff] %v381
  %414 = vst [vmem:[#allocation2 + $0x98] sm:$0xff] %v382
  %415 = vst [vmem:[#allocation2 + $0xa0] sm:$0xff] %v383
  %416 = vst [vmem:[#allocation2 + $0xa8] sm:$0xff] %v384
  %417 = vst [vmem:[#allocation2 + $0xb0] sm:$0xff] %v385
  %418 = vst [vmem:[#allocation2 + $0xb8] sm:$0xff] %v386
  %419 = vst [vmem:[#allocation2 + $0xc0] sm:$0xff] %v387
  %420 = vst [vmem:[#allocation2 + $0xc8] sm:$0xff] %v388
  %421 = vst [vmem:[#allocation2 + $0xd0] sm:$0xff] %v389
  %422 = vst [vmem:[#allocation2 + $0xd8] sm:$0xff] %v390
  %423 = vst [vmem:[#allocation2 + $0xe0] sm:$0xff] %v391
  %424 = vst [vmem:[#allocation2 + $0xe8] sm:$0xff] %v392
  %425 = vst [vmem:[#allocation2 + $0xf0] sm:$0xff] %v393
  %426 = vst [vmem:[#allocation2 + $0xf8] sm:$0xff] %v394
  // Predicated region
  $region18: #{nnet_am_forward.5} parent=0 // pred_check
    %p427 = pneg %p14
  $region19: #{nnet_am_forward.5} parent=0 // pred_check_branch
    %429 = sbr.rel (%p427) target = $region21
  $region20: #{nnet_am_forward.5} parent=0 // pred_region
    %v430 = vld [vmem:[#allocation2] sm:$0xff]
    %v431 = vld [vmem:[#allocation2 + $0x8] sm:$0xff]
    %v432 = vld [vmem:[#allocation2 + $0x10] sm:$0xff]
    %v433 = vld [vmem:[#allocation2 + $0x18] sm:$0xff]
    %v434 = vld [vmem:[#allocation2 + $0x20] sm:$0xff]
    %v435 = vld [vmem:[#allocation2 + $0x28] sm:$0xff]
    %v436 = vld [vmem:[#allocation2 + $0x30] sm:$0xff]
    %v437 = vld [vmem:[#allocation2 + $0x38] sm:$0xff]
    %v438 = vld [vmem:[#allocation2 + $0x40] sm:$0xff]
    %v439 = vld [vmem:[#allocation2 + $0x48] sm:$0xff]
    %v440 = vld [vmem:[#allocation2 + $0x50] sm:$0xff]
    %v441 = vld [vmem:[#allocation2 + $0x58] sm:$0xff]
    %v442 = vld [vmem:[#allocation2 + $0x60] sm:$0xff]
    %v443 = vld [vmem:[#allocation2 + $0x68] sm:$0xff]
    %v444 = vld [vmem:[#allocation2 + $0x70] sm:$0xff]
    %v445 = vld [vmem:[#allocation2 + $0x78] sm:$0xff]
    %v446 = vld [vmem:[#allocation2 + $0x80] sm:$0xff]
    %v447 = vld [vmem:[#allocation2 + $0x88] sm:$0xff]
    %v448 = vld [vmem:[#allocation2 + $0x90] sm:$0xff]
    %v449 = vld [vmem:[#allocation2 + $0x98] sm:$0xff]
    %v450 = vld [vmem:[#allocation2 + $0xa0] sm:$0xff]
    %v451 = vld [vmem:[#allocation2 + $0xa8] sm:$0xff]
    %v452 = vld [vmem:[#allocation2 + $0xb0] sm:$0xff]
    %v453 = vld [vmem:[#allocation2 + $0xb8] sm:$0xff]
    %v454 = vld [vmem:[#allocation2 + $0xc0] sm:$0xff]
    %v455 = vld [vmem:[#allocation2 + $0xc8] sm:$0xff]
    %v456 = vld [vmem:[#allocation2 + $0xd0] sm:$0xff]
    %v457 = vld [vmem:[#allocation2 + $0xd8] sm:$0xff]
    %v458 = vld [vmem:[#allocation2 + $0xe0] sm:$0xff]
    %v459 = vld [vmem:[#allocation2 + $0xe8] sm:$0xff]
    %v460 = vld [vmem:[#allocation2 + $0xf0] sm:$0xff]
    %v461 = vld [vmem:[#allocation2 + $0xf8] sm:$0xff]
    %v462 = vld [vmem:[%s2] sm:$0x1]
    %v464 = vperm.slane %v462, 0
    %v466 = vadd.f32 %v430, %v464
    %v467 = vadd.f32 %v431, %v464
    %v468 = vadd.f32 %v432, %v464
    %v469 = vadd.f32 %v433, %v464
    %v470 = vadd.f32 %v434, %v464
    %v471 = vadd.f32 %v435, %v464
    %v472 = vadd.f32 %v436, %v464
    %v473 = vadd.f32 %v437, %v464
    %v474 = vadd.f32 %v438, %v464
    %v475 = vadd.f32 %v439, %v464
    %v476 = vadd.f32 %v440, %v464
    %v477 = vadd.f32 %v441, %v464
    %v478 = vadd.f32 %v442, %v464
    %v479 = vadd.f32 %v443, %v464
    %v480 = vadd.f32 %v444, %v464
    %v481 = vadd.f32 %v445, %v464
    %v482 = vadd.f32 %v446, %v464
    %v483 = vadd.f32 %v447, %v464
    %v484 = vadd.f32 %v448, %v464
    %v485 = vadd.f32 %v449, %v464
    %v486 = vadd.f32 %v450, %v464
    %v487 = vadd.f32 %v451, %v464
    %v488 = vadd.f32 %v452, %v464
    %v489 = vadd.f32 %v453, %v464
    %v490 = vadd.f32 %v454, %v464
    %v491 = vadd.f32 %v455, %v464
    %v492 = vadd.f32 %v456, %v464
    %v493 = vadd.f32 %v457, %v464
    %v494 = vadd.f32 %v458, %v464
    %v495 = vadd.f32 %v459, %v464
    %v496 = vadd.f32 %v460, %v464
    %v497 = vadd.f32 %v461, %v464
    %498 = vst [vmem:[%s3] sm:$0xff] %v466
    %499 = vst [vmem:[%s3 + $0x8] sm:$0xff] %v467
    %500 = vst [vmem:[%s3 + $0x10] sm:$0xff] %v468
    %501 = vst [vmem:[%s3 + $0x18] sm:$0xff] %v469
    %502 = vst [vmem:[%s3 + $0x20] sm:$0xff] %v470
    %503 = vst [vmem:[%s3 + $0x28] sm:$0xff] %v471
    %504 = vst [vmem:[%s3 + $0x30] sm:$0xff] %v472
    %505 = vst [vmem:[%s3 + $0x38] sm:$0xff] %v473
    %506 = vst [vmem:[%s3 + $0x40] sm:$0xff] %v474
    %507 = vst [vmem:[%s3 + $0x48] sm:$0xff] %v475
    %508 = vst [vmem:[%s3 + $0x50] sm:$0xff] %v476
    %509 = vst [vmem:[%s3 + $0x58] sm:$0xff] %v477
    %510 = vst [vmem:[%s3 + $0x60] sm:$0xff] %v478
    %511 = vst [vmem:[%s3 + $0x68] sm:$0xff] %v479
    %512 = vst [vmem:[%s3 + $0x70] sm:$0xff] %v480
    %513 = vst [vmem:[%s3 + $0x78] sm:$0xff] %v481
    %514 = vst [vmem:[%s3 + $0x80] sm:$0xff] %v482
    %515 = vst [vmem:[%s3 + $0x88] sm:$0xff] %v483
    %516 = vst [vmem:[%s3 + $0x90] sm:$0xff] %v484
    %517 = vst [vmem:[%s3 + $0x98] sm:$0xff] %v485
    %518 = vst [vmem:[%s3 + $0xa0] sm:$0xff] %v486
    %519 = vst [vmem:[%s3 + $0xa8] sm:$0xff] %v487
    %520 = vst [vmem:[%s3 + $0xb0] sm:$0xff] %v488
    %521 = vst [vmem:[%s3 + $0xb8] sm:$0xff] %v489
    %522 = vst [vmem:[%s3 + $0xc0] sm:$0xff] %v490
    %523 = vst [vmem:[%s3 + $0xc8] sm:$0xff] %v491
    %524 = vst [vmem:[%s3 + $0xd0] sm:$0xff] %v492
    %525 = vst [vmem:[%s3 + $0xd8] sm:$0xff] %v493
    %526 = vst [vmem:[%s3 + $0xe0] sm:$0xff] %v494
    %527 = vst [vmem:[%s3 + $0xe8] sm:$0xff] %v495
    %528 = vst [vmem:[%s3 + $0xf0] sm:$0xff] %v496
    %529 = vst [vmem:[%s3 + $0xf8] sm:$0xff] %v497
  $region21: #{nnet_am_forward.5} parent=0 // pred_fallthru
    _
  // Predicated region
  $region22: #{nnet_am_forward.5} parent=0 // pred_check
    _
  $region23: #{nnet_am_forward.5} parent=0 // pred_check_branch
    %531 = sbr.rel (0) target = $region25
  $region24: #{nnet_am_forward.5} parent=0 // pred_region
    _
  $region25: #{nnet_am_forward.5} parent=0 // pred_fallthru
    _
  // Predicated region
  $region26: #{nnet_am_forward.5} parent=0 // pred_check
    _
  $region27: #{nnet_am_forward.5} parent=0 // pred_check_branch
    %533 = sbr.rel (0) target = $region29
  $region28: #{nnet_am_forward.5} parent=0 // pred_region
    _
  $region29: #{nnet_am_forward.5} parent=0 // pred_fallthru
    _

</llo_original>
